<compile_context>
chip_gen: v6e
topology: v6e:2x2x1
jax: 0.10.0
libtpu: 0.0.40
codegen_flags: <defaults>
</compile_context>

<pallas_src>
import functools

import jax
import jax.numpy as jnp
from jax.experimental import pallas as pl
from jax.experimental.pallas import tpu as pltpu

_MIB = 1024 * 1024


# --------------------------------------------------------------------------- #
# Kernels
# --------------------------------------------------------------------------- #
def _cln_kernel_3d(x_ref, w_ref, b_ref, o_ref, *, eps: float, inv_c: float):
    """x_ref: (1, C, tile_hw) block; channel reduction over axis=1 (sublanes)."""
    x = x_ref[...].astype(jnp.float32)
    s1 = jnp.sum(x, axis=1, keepdims=True) * inv_c         # mean,   (1, 1, tile_hw)
    s2 = jnp.sum(x * x, axis=1, keepdims=True) * inv_c     # E[x^2], (1, 1, tile_hw)
    var = jnp.maximum(s2 - s1 * s1, 0.0)
    inv = jax.lax.rsqrt(var + eps)                          # EUP slot, ~free
    w = w_ref[...].astype(jnp.float32)                      # (1, C, 1)
    b = b_ref[...].astype(jnp.float32)                      # (1, C, 1)
    o_ref[...] = ((x - s1) * inv * w + b).astype(o_ref.dtype)


def _cln_kernel_4d(x_ref, w_ref, b_ref, o_ref, *, eps: float, inv_c: float):
    """x_ref: (1, C, S, 128) block; channel reduction = C-1 elementwise VPU adds."""
    x = x_ref[...].astype(jnp.float32)
    s1 = jnp.sum(x, axis=1, keepdims=True) * inv_c          # (1, 1, S, 128)
    s2 = jnp.sum(x * x, axis=1, keepdims=True) * inv_c
    var = jnp.maximum(s2 - s1 * s1, 0.0)
    inv = jax.lax.rsqrt(var + eps)
    w = w_ref[...].astype(jnp.float32)                       # (1, C, 1, 128), lane-dense
    b = b_ref[...].astype(jnp.float32)
    o_ref[...] = ((x - s1) * inv * w + b).astype(o_ref.dtype)


# --------------------------------------------------------------------------- #
# Generation-aware budgets
# --------------------------------------------------------------------------- #
def _vmem_capacity_bytes() -> int:
    try:
        return int(pltpu.get_tpu_info().vmem_capacity_bytes)
    except Exception:
        return 64 * _MIB  # conservative (v7x-class) fallback


def _budgets():
    """Return (vmem_capacity, max f32-block bytes) for this TPU generation."""
    cap = _vmem_capacity_bytes()
    if cap <= 64 * _MIB:          # v7x-class: 64 MiB VMEM per TensorCore
        return cap, 2 * _MIB
    return cap, 4 * _MIB          # v5e / v6e: 128 MiB VMEM


def _vmem_limit_bytes(cap: int, block_elems: int, in_itemsize: int) -> int:
    """Explicit accounting: 2x in + 2x out double buffers (input dtype) plus the
    f32 intermediates Mosaic materializes, with slack.  Never below the 32 MiB
    platform-default scoped limit; leave headroom under the physical capacity."""
    in_bytes = block_elems * in_itemsize
    f32_bytes = block_elems * 4
    needed = 4 * in_bytes + 6 * f32_bytes + 2 * _MIB
    limit = max(32 * _MIB, needed)
    limit = min(limit, (cap * 3) // 4)
    return int(max(limit, 32 * _MIB))


# --------------------------------------------------------------------------- #
# Tile pickers (always lane-aligned; enforce a minimum number of grid steps)
# --------------------------------------------------------------------------- #
def _pick_tile_hw(C: int, HW: int, max_block_bytes: int, n_batch: int,
                  min_steps: int = 4) -> int:
    """Lane tile for the (N, C, HW) layout: a multiple of 128 within the f32
    byte budget; shrink until there are enough grid steps to pipeline."""
    if HW < 128:
        return HW                                   # full extent; always tiny
    per_lane_f32 = 4 * C
    budget = max(128, (max_block_bytes // per_lane_f32) // 128 * 128)
    tile = min(budget, (HW // 128) * 128)
    while tile > 128 and n_batch * pl.cdiv(HW, tile) < min_steps:
        tile = max(128, ((tile // 2) // 128) * 128)
    return tile


def _pick_tile_rows(C: int, rows: int, max_block_bytes: int, n_batch: int,
                    min_steps: int = 4) -> int:
    """Sublane-row tile for the (N, C, rows, 128) layout: a multiple of 8 (or the
    full extent when rows < 8) within the f32 byte budget."""
    if rows <= 8:
        return rows                                 # full extent (valid as-is)
    per_row_f32 = 4 * C * 128
    budget = max(8, (max_block_bytes // per_row_f32) // 8 * 8)
    s = min(budget, (rows // 8) * 8)
    while s > 8 and n_batch * pl.cdiv(rows, s) < min_steps:
        s = max(8, ((s // 2) // 8) * 8)
    return s


# --------------------------------------------------------------------------- #
# Wrapper
# --------------------------------------------------------------------------- #
def conv_layer_norm(x, weight=None, bias=None, *, eps: float = 1e-5):
    """x: (N, C, *spatial) channel-first tensor; weight/bias: (C,) or None.
    Normalizes over the channel dim (dim 1), matching ConvLayerNorm.forward."""
    orig_shape = x.shape
    N, C = int(orig_shape[0]), int(orig_shape[1])
    HW = 1
    for d in orig_shape[2:]:
        HW *= int(d)

    if weight is None:  # elementwise_affine=False -> identity affine
        weight = jnp.ones((C,), dtype=x.dtype)
    if bias is None:
        bias = jnp.zeros((C,), dtype=x.dtype)

    x3d = x.reshape(N, C, HW)                       # contiguous: no data movement
    itemsize = x.dtype.itemsize
    inv_c = 1.0 / C
    cap, max_block_bytes = _budgets()

    small_c = C < (8 if itemsize >= 4 else 16)
    use_4d = small_c and HW >= 128 and HW % 128 == 0

    if use_4d:
        # Packed layout for tiny C: full (8,128) vregs, pure-VPU channel reduce.
        rows = HW // 128
        S = _pick_tile_rows(C, rows, max_block_bytes, N)
        grid = (N, pl.cdiv(rows, S))
        x4d = x3d.reshape(N, C, rows, 128)
        w4d = jnp.broadcast_to(weight.reshape(1, C, 1, 1), (1, C, 1, 128))
        b4d = jnp.broadcast_to(bias.reshape(1, C, 1, 1), (1, C, 1, 128))
        vmem_limit = _vmem_limit_bytes(cap, C * S * 128, itemsize)
        kernel = functools.partial(_cln_kernel_4d, eps=eps, inv_c=inv_c)

        out = pl.pallas_call(
            kernel,
            out_shape=jax.ShapeDtypeStruct((N, C, rows, 128), x.dtype),
            grid_spec=pltpu.PrefetchScalarGridSpec(
                num_scalar_prefetch=0,
                grid=grid,
                in_specs=[
                    pl.BlockSpec((1, C, S, 128), lambda n, j: (n, 0, j, 0)),
                    pl.BlockSpec((1, C, 1, 128), lambda n, j: (0, 0, 0, 0)),
                    pl.BlockSpec((1, C, 1, 128), lambda n, j: (0, 0, 0, 0)),
                ],
                out_specs=pl.BlockSpec((1, C, S, 128), lambda n, j: (n, 0, j, 0)),
            ),
            compiler_params=pltpu.CompilerParams(
                dimension_semantics=("parallel", "parallel"),
                vmem_limit_bytes=vmem_limit,
            ),
        )(x4d, w4d, b4d)
        return out.reshape(orig_shape)

    # General layout: (1, C, tile_hw) blocks, tile_hw a multiple of 128 (or the
    # full extent only when HW < 128); ragged tails handled by the cdiv grid.
    tile_hw = _pick_tile_hw(C, HW, max_block_bytes, N)
    grid = (N, pl.cdiv(HW, tile_hw))
    w3d = weight.reshape(1, C, 1)
    b3d = bias.reshape(1, C, 1)
    vmem_limit = _vmem_limit_bytes(cap, C * tile_hw, itemsize)
    kernel = functools.partial(_cln_kernel_3d, eps=eps, inv_c=inv_c)

    out = pl.pallas_call(
        kernel,
        out_shape=jax.ShapeDtypeStruct((N, C, HW), x.dtype),
        grid_spec=pltpu.PrefetchScalarGridSpec(
            num_scalar_prefetch=0,
            grid=grid,
            in_specs=[
                pl.BlockSpec((1, C, tile_hw), lambda n, j: (n, 0, j)),
                pl.BlockSpec((1, C, 1), lambda n, j: (0, 0, 0)),
                pl.BlockSpec((1, C, 1), lambda n, j: (0, 0, 0)),
            ],
            out_specs=pl.BlockSpec((1, C, tile_hw), lambda n, j: (n, 0, j)),
        ),
        compiler_params=pltpu.CompilerParams(
            dimension_semantics=("parallel", "parallel"),
            vmem_limit_bytes=vmem_limit,
        ),
    )(x3d, w3d, b3d)
    return out.reshape(orig_shape)


# --------------------------------------------------------------------------- #
# Reference (mirrors ConvLayerNorm.forward)
# --------------------------------------------------------------------------- #
def _reference(x, weight, bias, eps=1e-5):
    mean = jnp.mean(x, axis=1, keepdims=True)
    var = jnp.mean(jnp.square(x - mean), axis=1, keepdims=True)
    norm = (x - mean) / jnp.sqrt(var + eps)
    return norm * weight.reshape(1, -1, 1, 1) + bias.reshape(1, -1, 1, 1)


if __name__ == "__main__":
    key = jax.random.PRNGKey(0)
    N, C, H, W = 2, 4, 16, 16  # NCHW, matching the PyTorch module's conv input

    x = jax.random.normal(key, (N, C, H, W), dtype=jnp.float32)
    # Deterministic parameter init per ConvLayerNorm.reset_parameters():
    # weight = ones(C), bias = zeros(C).
    weight = jnp.ones((C,), dtype=jnp.float32)
    bias = jnp.zeros((C,), dtype=jnp.float32)

    out = conv_layer_norm(x, weight, bias, eps=1e-5)
    out = jax.block_until_ready(out)

    ref = _reference(x, weight, bias, eps=1e-5)
    assert out.shape == (N, C, H, W)
    assert jnp.allclose(out, ref, atol=1e-4, rtol=1e-4), float(
        jnp.max(jnp.abs(out - ref)))

    print("KERNEL_OK")
</pallas_src>

<mosaic_0001>
module attributes {stable_mosaic.version = 11 : i64} {
  func.func @_cln_kernel_4d(%arg0: i32, %arg1: i32, %arg2: memref<1x4x2x128xf32, #tpu.memory_space<vmem>>, %arg3: memref<1x4x1x128xf32, #tpu.memory_space<vmem>>, %arg4: memref<1x4x1x128xf32, #tpu.memory_space<vmem>>, %arg5: memref<1x4x2x128xf32, #tpu.memory_space<vmem>>) attributes {dimension_semantics = [#tpu.dimension_semantics<parallel>, #tpu.dimension_semantics<parallel>], iteration_bounds = array<i64: 2, 1>, scalar_prefetch = 0 : i64, scratch_operands = 0 : i64, tpu.core_type = #tpu.core_type<tc>, window_params = [{transform_indices = @transform_0, window_bounds = array<i64: 1, 4, 2, 128>}, {pipeline_mode = #tpu.pipeline_mode<synchronous>, transform_indices = @transform_1, window_bounds = array<i64: 1, 4, 1, 128>}, {pipeline_mode = #tpu.pipeline_mode<synchronous>, transform_indices = @transform_2, window_bounds = array<i64: 1, 4, 1, 128>}, {transform_indices = @transform_3, window_bounds = array<i64: 1, 4, 2, 128>}]} {
    %c0 = arith.constant 0 : index
    %c0_0 = arith.constant 0 : index
    %c0_1 = arith.constant 0 : index
    %c0_2 = arith.constant 0 : index
    %0 = vector.load %arg2[%c0, %c0_0, %c0_1, %c0_2] : memref<1x4x2x128xf32, #tpu.memory_space<vmem>>, vector<1x4x2x128xf32>
    %cst = arith.constant dense<0.000000e+00> : vector<1x2x128xf32>
    %1 = vector.multi_reduction <add>, %0, %cst [1] : vector<1x4x2x128xf32> to vector<1x2x128xf32>
    %2 = vector.shape_cast %1 : vector<1x2x128xf32> to vector<1x1x2x128xf32>
    %cst_3 = arith.constant 2.500000e-01 : f32
    %3 = vector.broadcast %cst_3 : f32 to vector<1x1x2x128xf32>
    %4 = arith.mulf %2, %3 : vector<1x1x2x128xf32>
    %5 = arith.mulf %0, %0 : vector<1x4x2x128xf32>
    %cst_4 = arith.constant dense<0.000000e+00> : vector<1x2x128xf32>
    %6 = vector.multi_reduction <add>, %5, %cst_4 [1] : vector<1x4x2x128xf32> to vector<1x2x128xf32>
    %7 = vector.shape_cast %6 : vector<1x2x128xf32> to vector<1x1x2x128xf32>
    %cst_5 = arith.constant 2.500000e-01 : f32
    %8 = vector.broadcast %cst_5 : f32 to vector<1x1x2x128xf32>
    %9 = arith.mulf %7, %8 : vector<1x1x2x128xf32>
    %10 = arith.mulf %4, %4 : vector<1x1x2x128xf32>
    %11 = arith.subf %9, %10 : vector<1x1x2x128xf32>
    %cst_6 = arith.constant 0.000000e+00 : f32
    %12 = vector.broadcast %cst_6 : f32 to vector<1x1x2x128xf32>
    %13 = arith.maximumf %11, %12 : vector<1x1x2x128xf32>
    %cst_7 = arith.constant 9.99999974E-6 : f32
    %14 = vector.broadcast %cst_7 : f32 to vector<1x1x2x128xf32>
    %15 = arith.addf %13, %14 : vector<1x1x2x128xf32>
    %16 = math.rsqrt %15 : vector<1x1x2x128xf32>
    %c0_8 = arith.constant 0 : index
    %c0_9 = arith.constant 0 : index
    %c0_10 = arith.constant 0 : index
    %c0_11 = arith.constant 0 : index
    %17 = vector.load %arg3[%c0_8, %c0_9, %c0_10, %c0_11] : memref<1x4x1x128xf32, #tpu.memory_space<vmem>>, vector<1x4x1x128xf32>
    %c0_12 = arith.constant 0 : index
    %c0_13 = arith.constant 0 : index
    %c0_14 = arith.constant 0 : index
    %c0_15 = arith.constant 0 : index
    %18 = vector.load %arg4[%c0_12, %c0_13, %c0_14, %c0_15] : memref<1x4x1x128xf32, #tpu.memory_space<vmem>>, vector<1x4x1x128xf32>
    %19 = vector.broadcast %4 : vector<1x1x2x128xf32> to vector<1x4x2x128xf32>
    %20 = arith.subf %0, %19 : vector<1x4x2x128xf32>
    %21 = vector.broadcast %16 : vector<1x1x2x128xf32> to vector<1x4x2x128xf32>
    %22 = arith.mulf %20, %21 : vector<1x4x2x128xf32>
    %23 = vector.broadcast %17 : vector<1x4x1x128xf32> to vector<1x4x2x128xf32>
    %24 = arith.mulf %22, %23 : vector<1x4x2x128xf32>
    %25 = vector.broadcast %18 : vector<1x4x1x128xf32> to vector<1x4x2x128xf32>
    %26 = arith.addf %24, %25 : vector<1x4x2x128xf32>
    %c0_16 = arith.constant 0 : index
    %c0_17 = arith.constant 0 : index
    %c0_18 = arith.constant 0 : index
    %c0_19 = arith.constant 0 : index
    %27 = vector.load %arg5[%c0_16, %c0_17, %c0_18, %c0_19] : memref<1x4x2x128xf32, #tpu.memory_space<vmem>>, vector<1x4x2x128xf32>
    tpu.vector_store %arg5[%c0_16, %c0_17, %c0_18, %c0_19], %26 {strides = array<i32>} : memref<1x4x2x128xf32, #tpu.memory_space<vmem>>, vector<1x4x2x128xf32>,
    return
  }
  func.func @transform_0(%arg0: i32, %arg1: i32) -> (i32, i32, i32, i32) {
    %c0_i32 = arith.constant 0 : i32
    %c0_i32_0 = arith.constant 0 : i32
    %c0_i32_1 = arith.constant 0 : i32
    return %arg0, %c0_i32, %arg1, %c0_i32_0 : i32, i32, i32, i32
  }
  func.func @transform_1(%arg0: i32, %arg1: i32) -> (i32, i32, i32, i32) {
    %c0_i32 = arith.constant 0 : i32
    %c0_i32_0 = arith.constant 0 : i32
    %c0_i32_1 = arith.constant 0 : i32
    %c0_i32_2 = arith.constant 0 : i32
    %c0_i32_3 = arith.constant 0 : i32
    return %c0_i32, %c0_i32_0, %c0_i32_1, %c0_i32_2 : i32, i32, i32, i32
  }
  func.func @transform_2(%arg0: i32, %arg1: i32) -> (i32, i32, i32, i32) {
    %c0_i32 = arith.constant 0 : i32
    %c0_i32_0 = arith.constant 0 : i32
    %c0_i32_1 = arith.constant 0 : i32
    %c0_i32_2 = arith.constant 0 : i32
    %c0_i32_3 = arith.constant 0 : i32
    return %c0_i32, %c0_i32_0, %c0_i32_1, %c0_i32_2 : i32, i32, i32, i32
  }
  func.func @transform_3(%arg0: i32, %arg1: i32) -> (i32, i32, i32, i32) {
    %c0_i32 = arith.constant 0 : i32
    %c0_i32_0 = arith.constant 0 : i32
    %c0_i32_1 = arith.constant 0 : i32
    return %arg0, %c0_i32, %arg1, %c0_i32_0 : i32, i32, i32, i32
  }
}

</mosaic_0001>

<llo_original>
// kernel: tpu_custom_call.1
$region0: #{tpu_custom_call.1}
  #allocation0 [shape = 'u32[]', space=smem, size = 0x4, offset = 0x4, fixed_abs, tag = 'smem constant byte address 0x4 - core index']
  #allocation1 [shape = 'u32[144,128]{1,0:T(1,128)}', space=vmem, size = 0x12000, scoped, tag = 'internal scratch']
  %s0 = inlined_call_operand.hbm [shape: f32[2,4,2,128], index: 0, kind: input, shape index: {}]
  %s1 = inlined_call_operand.hbm [shape: f32[1,4,1,128], index: 1, kind: input, shape index: {}]
  %s2 = inlined_call_operand.hbm [shape: f32[1,4,1,128], index: 2, kind: input, shape index: {}]
  %s3 = inlined_call_operand.hbm [shape: f32[2,4,2,128], index: 3, kind: output, shape index: {}]
  %s4 = sld [smem:[#allocation0]]
  $region57: #{tpu_custom_call.1} parent=0
    _
  %s6 = ssub.s32 1, %s4
  %s7 = scalar_select 0, %s6, %s4
  $region1: #{tpu_custom_call.1} parent=0
    #allocation2 [shape = 'u8[8192]{0}', space=vmem, size = 0x2000, scoped, tag = 'input window, operand 0']
    #allocation3 [shape = 's32[2]{0}', space=sflag, size = 0x8, scoped, tag = 'scoped memory for tpu_custom_call.1']
    #allocation4 [shape = 's32[2]{0}', space=sflag, size = 0x8, scoped, tag = 'scoped memory for tpu_custom_call.1']
    #allocation5 [shape = 'u8[2048]{0}', space=vmem, size = 0x800, scoped, tag = 'input window, operand 1, single buffered']
    #allocation6 [shape = 's32[1]{0}', space=sflag, size = 0x4, scoped, tag = 'scoped memory for tpu_custom_call.1']
    #allocation7 [shape = 'u8[2048]{0}', space=vmem, size = 0x800, scoped, tag = 'input window, operand 2, single buffered']
    #allocation8 [shape = 'u8[8192]{0}', space=vmem, size = 0x2000, scoped, tag = 'output window, operand 0']
    %8 = vsyncpa [#allocation3], 0
    %s9 = scalar_lea.sflag [#allocation3], 1
    %10 = vsyncpa %s9, 0
    %11 = vsyncpa [#allocation6], 0
    %12 = vsyncpa [#allocation4], 0
    %s13 = scalar_lea.sflag [#allocation4], 1
    %14 = vsyncpa %s13, 0
    loop: start=0, step=1, limit=4
    $region2: #{tpu_custom_call.1} parent=1 // loop_pre_header
      _
    $region3: #{tpu_custom_call.1} parent=1 // loop_header
      %s16 = sphi 0, %s20
      %p17 = scmp.ge.s32.totalorder %s16, 4
      %s23 = sphi 0, %s35
      %s24 = sphi 0, %s31
      %s25 = sphi 0, %s23
      %s26 = sphi 0, %s24
      %s27 = sphi 0, %s25
      %s28 = sphi 0, %s26
      %s40 = sphi 0, %s42
      %s43 = sphi 0, %s40
      %s44 = sphi 0, %s43
      %s60 = sphi 0, %s44
      %s64 = sphi 0, %s64
      %s66 = sphi 0, %s64
      %s67 = sphi 0, %s66
      %s81 = sphi 0, %s67
      %s85 = sphi 0, %s85
      %s87 = sphi 0, %s85
      %s88 = sphi 0, %s87
      %s102 = sphi 0, %s88
      %s110 = sphi 0, %s112
      %s113 = sphi 0, %s110
      %s114 = sphi 0, %s113
      %s130 = sphi 0, %s114
    $region4: #{tpu_custom_call.1} parent=1 // loop_header_branch
      %19 = sbr.rel (%p17) target = $region8
    $region5: #{tpu_custom_call.1} parent=1 // loop_body
      %s21 = ssub.s32 %s16, 1
      %s22 = ssub.s32 %s16, 2
      %s29 = sadd.s32 1, %s24
      %p30 = scmp.ge.s32.totalorder %s29, 1
      %s31 = scalar_select %p30, 0, %s29
      %s32 = sadd.s32 1, %s23
      %s33 = scalar_select %p30, %s32, %s23
      %p34 = scmp.ge.s32.totalorder %s33, 2
      %s35 = scalar_select %p34, 0, %s33
      %s36 = ssub.s32 %s23, %s35
      %s37 = ssub.s32 %s24, %s31
      %s38 = sor.u32 %s36, %s37
      %p39 = scmp.eq.s32.totalorder %s38, 0
      %s41 = sadd.s32 %s40, 1
      %s42 = scalar_select %p39, %s40, %s41
      %p45 = pneg %p39
      %p46 = scmp.eq.s32.totalorder %s16, 1
      %p47 = por %p45, %p46
      %p48 = scmp.ne.s32.totalorder %s40, %s43
      %p49 = scmp.eq.s32.totalorder %s16, 0
      %p50 = por %p48, %p49
      %p51 = scmp.ne.s32.totalorder %s40, %s43
      %p52 = scmp.eq.s32.totalorder %s21, 1
      %p53 = por %p51, %p52
      %p54 = scmp.ne.s32.totalorder %s43, %s44
      %p55 = scmp.eq.s32.totalorder %s21, 0
      %p56 = por %p54, %p55
      %p57 = scmp.ne.s32.totalorder %s43, %s44
      %p58 = scmp.eq.s32.totalorder %s22, 1
      %p59 = por %p57, %p58
      %p61 = scmp.ne.s32.totalorder %s44, %s60
      %p62 = scmp.eq.s32.totalorder %s22, 0
      %p63 = por %p61, %p62
      %s65 = sadd.s32 %s64, 1
      %p68 = scmp.eq.s32.totalorder %s16, 1
      %p69 = scmp.ne.s32.totalorder %s64, %s66
      %p70 = scmp.eq.s32.totalorder %s16, 0
      %p71 = por %p69, %p70
      %p72 = scmp.ne.s32.totalorder %s64, %s66
      %p73 = scmp.eq.s32.totalorder %s21, 1
      %p74 = por %p72, %p73
      %p75 = scmp.ne.s32.totalorder %s66, %s67
      %p76 = scmp.eq.s32.totalorder %s21, 0
      %p77 = por %p75, %p76
      %p78 = scmp.ne.s32.totalorder %s66, %s67
      %p79 = scmp.eq.s32.totalorder %s22, 1
      %p80 = por %p78, %p79
      %p82 = scmp.ne.s32.totalorder %s67, %s81
      %p83 = scmp.eq.s32.totalorder %s22, 0
      %p84 = por %p82, %p83
      %s86 = sadd.s32 %s85, 1
      %p89 = scmp.eq.s32.totalorder %s16, 1
      %p90 = scmp.ne.s32.totalorder %s85, %s87
      %p91 = scmp.eq.s32.totalorder %s16, 0
      %p92 = por %p90, %p91
      %p93 = scmp.ne.s32.totalorder %s85, %s87
      %p94 = scmp.eq.s32.totalorder %s21, 1
      %p95 = por %p93, %p94
      %p96 = scmp.ne.s32.totalorder %s87, %s88
      %p97 = scmp.eq.s32.totalorder %s21, 0
      %p98 = por %p96, %p97
      %p99 = scmp.ne.s32.totalorder %s87, %s88
      %p100 = scmp.eq.s32.totalorder %s22, 1
      %p101 = por %p99, %p100
      %p103 = scmp.ne.s32.totalorder %s88, %s102
      %p104 = scmp.eq.s32.totalorder %s22, 0
      %p105 = por %p103, %p104
      %s106 = ssub.s32 %s23, %s35
      %s107 = ssub.s32 %s24, %s31
      %s108 = sor.u32 %s106, %s107
      %p109 = scmp.eq.s32.totalorder %s108, 0
      %s111 = sadd.s32 %s110, 1
      %s112 = scalar_select %p109, %s110, %s111
      %p115 = pneg %p109
      %p116 = scmp.eq.s32.totalorder %s16, 1
      %p117 = por %p115, %p116
      %p118 = scmp.ne.s32.totalorder %s110, %s113
      %p119 = scmp.eq.s32.totalorder %s16, 0
      %p120 = por %p118, %p119
      %p121 = scmp.ne.s32.totalorder %s110, %s113
      %p122 = scmp.eq.s32.totalorder %s21, 1
      %p123 = por %p121, %p122
      %p124 = scmp.ne.s32.totalorder %s113, %s114
      %p125 = scmp.eq.s32.totalorder %s21, 0
      %p126 = por %p124, %p125
      %p127 = scmp.ne.s32.totalorder %s113, %s114
      %p128 = scmp.eq.s32.totalorder %s22, 1
      %p129 = por %p127, %p128
      %p131 = scmp.ne.s32.totalorder %s114, %s130
      %p132 = scmp.eq.s32.totalorder %s22, 0
      %p133 = por %p131, %p132
      %p134 = scmp.le.s32.totalorder 1, %s16
      %p135 = scmp.lt.s32.totalorder %s16, 3
      %p136 = pnand %p134, %p135
      %p137 = pneg %p136
      // Predicated region
      $region9: #{tpu_custom_call.1} parent=5 // pred_check
        _
      $region10: #{tpu_custom_call.1} parent=5 // pred_check_branch
        %139 = sbr.rel (%p136) target = $region12
      $region11: #{tpu_custom_call.1} parent=5 // pred_region
        %s140 = ssub.s32 %s16, 1
        // Predicated region
        $region13: #{tpu_custom_call.1} parent=11 // pred_check
          %p141 = pneg %p77
        $region14: #{tpu_custom_call.1} parent=11 // pred_check_branch
          %143 = sbr.rel (%p141) target = $region16
        $region15: #{tpu_custom_call.1} parent=11 // pred_region
          %s145 = ssub.s32 64, 64
          %146 = vsyncadd [#allocation6], %s145
          %s147 = sshll.u32 [#allocation5], 4
          %s148 = int_to_ptr.vmem [resolvable:$true] %s147
          %153 = dma.hbm_to_vmem [thread:$0]  %s1, 64, %s148, [#allocation6], 16, 16, 1
        $region16: #{tpu_custom_call.1} parent=11 // pred_fallthru
          _
        // Predicated region
        $region17: #{tpu_custom_call.1} parent=11 // pred_check
          %p154 = pneg %p98
        $region18: #{tpu_custom_call.1} parent=11 // pred_check_branch
          %156 = sbr.rel (%p154) target = $region20
        $region19: #{tpu_custom_call.1} parent=11 // pred_region
          %s158 = ssub.s32 64, 64
          %159 = vsyncadd [#allocation6], %s158
          %s160 = sshll.u32 [#allocation7], 4
          %s161 = int_to_ptr.vmem [resolvable:$true] %s160
          %166 = dma.hbm_to_vmem [thread:$0]  %s2, 64, %s161, [#allocation6], 16, 16, 1
        $region20: #{tpu_custom_call.1} parent=11 // pred_fallthru
          _
      $region12: #{tpu_custom_call.1} parent=5 // pred_fallthru
        _
      %p167 = scmp.lt.s32.totalorder %s16, 2
      // Predicated region
      $region21: #{tpu_custom_call.1} parent=5 // pred_check
        %p168 = pneg %p167
      $region22: #{tpu_custom_call.1} parent=5 // pred_check_branch
        %170 = sbr.rel (%p168) target = $region24
      $region23: #{tpu_custom_call.1} parent=5 // pred_region
        // Predicated region
        $region25: #{tpu_custom_call.1} parent=23 // pred_check
          %p171 = pneg %p50
        $region26: #{tpu_custom_call.1} parent=23 // pred_check_branch
          %173 = sbr.rel (%p171) target = $region28
        $region27: #{tpu_custom_call.1} parent=23 // pred_region
          %s174 = sand.u32 %s40, 1
          %s175 = scalar_lea.sflag [#allocation3], %s174
          %s176 = sand.u32 %s40, 1
          %s177 = smul.addr %s176, 8
          %s178 = scalar_lea.vmem [#allocation2], %s177
          %s180 = ssub.s32 128, 128
          %181 = vsyncadd %s175, %s180
          %s182 = smul.addr %s23, 4
          %s183 = sadd.s32 %s24, %s182
          %s184 = smul.addr %s183, 32
          %s185 = scalar_lea.hbm %s0, %s184
          %s186 = sshll.u32 %s178, 4
          %s187 = int_to_ptr.vmem [resolvable:$true] %s186
          %192 = dma.hbm_to_vmem [thread:$0]  %s185, 128, %s187, %s175, 32, 32, 2
        $region28: #{tpu_custom_call.1} parent=23 // pred_fallthru
          _
      $region24: #{tpu_custom_call.1} parent=5 // pred_fallthru
        _
      %p193 = scmp.le.s32.totalorder 1, %s16
      %p194 = scmp.lt.s32.totalorder %s16, 3
      %p195 = pnand %p193, %p194
      %p196 = pneg %p195
      // Predicated region
      $region29: #{tpu_custom_call.1} parent=5 // pred_check
        _
      $region30: #{tpu_custom_call.1} parent=5 // pred_check_branch
        %198 = sbr.rel (%p195) target = $region32
      $region31: #{tpu_custom_call.1} parent=5 // pred_region
        %s199 = ssub.s32 %s16, 1
        %s200 = sand.u32 %s43, 1
        %s201 = scalar_lea.sflag [#allocation3], %s200
        %s202 = sand.u32 %s43, 1
        %s203 = smul.addr %s202, 8
        %s204 = scalar_lea.vmem [#allocation2], %s203
        // Predicated region
        $region33: #{tpu_custom_call.1} parent=31 // pred_check
          %p205 = pneg %p56
        $region34: #{tpu_custom_call.1} parent=31 // pred_check_branch
          %207 = sbr.rel (%p205) target = $region36
        $region35: #{tpu_custom_call.1} parent=31 // pred_region
          %208 = dma.done %s201, 128
        $region36: #{tpu_custom_call.1} parent=31 // pred_fallthru
          _
        // Predicated region
        $region37: #{tpu_custom_call.1} parent=31 // pred_check
          %p209 = pneg %p77
        $region38: #{tpu_custom_call.1} parent=31 // pred_check_branch
          %211 = sbr.rel (%p209) target = $region40
        $region39: #{tpu_custom_call.1} parent=31 // pred_region
          %212 = dma.done [#allocation6], 64
        $region40: #{tpu_custom_call.1} parent=31 // pred_fallthru
          _
        // Predicated region
        $region41: #{tpu_custom_call.1} parent=31 // pred_check
          %p213 = pneg %p98
        $region42: #{tpu_custom_call.1} parent=31 // pred_check_branch
          %215 = sbr.rel (%p213) target = $region44
        $region43: #{tpu_custom_call.1} parent=31 // pred_region
          %216 = dma.done [#allocation6], 64
        $region44: #{tpu_custom_call.1} parent=31 // pred_fallthru
          _
        %s217 = sand.u32 %s43, 1
        %s218 = scalar_lea.sflag [#allocation3], %s217
        %s219 = sand.u32 %s43, 1
        %s220 = smul.addr %s219, 8
        %s221 = scalar_lea.vmem [#allocation2], %s220
        %p222 = pneg %p56
        %p223 = pneg %p53
        %p224 = pneg %p77
        %p225 = pneg %p74
        %p226 = pneg %p98
        %p227 = pneg %p95
        %p228 = pneg %p126
        %p229 = pneg %p123
        %s230 = sand.u32 %s113, 1
        %s231 = scalar_lea.sflag [#allocation4], %s230
        %s232 = sand.u32 %s113, 1
        %s233 = smul.addr %s232, 8
        %s234 = scalar_lea.vmem [#allocation8], %s233
        %v235 = vld [vmem:[%s204] sm:$0x3]
        %v236 = vld [vmem:[%s204 + $0x2] sm:$0x3]
        %v237 = vld [vmem:[%s204 + $0x4] sm:$0x3]
        %v238 = vld [vmem:[%s204 + $0x6] sm:$0x3]
        %vm239 = vcmask 1041408
        %v240 = vsel %vm239, %v235, 0.0
        %v241 = vsel %vm239, %v236, 0.0
        %v242 = vadd.f32 %v240, %v241
        %v243 = vsel %vm239, %v237, 0.0
        %v244 = vadd.f32 %v242, %v243
        %v245 = vsel %vm239, %v238, 0.0
        %v246 = vadd.f32 %v244, %v245
        %v247 = vmul.f32 %v246, 0.25
        %v248 = vmul.f32 %v235, %v235
        %v249 = vmul.f32 %v236, %v236
        %v250 = vmul.f32 %v237, %v237
        %v251 = vmul.f32 %v238, %v238
        %v252 = vsel %vm239, %v248, 0.0
        %v253 = vsel %vm239, %v249, 0.0
        %v254 = vadd.f32 %v252, %v253
        %v255 = vsel %vm239, %v250, 0.0
        %v256 = vadd.f32 %v254, %v255
        %v257 = vsel %vm239, %v251, 0.0
        %v258 = vadd.f32 %v256, %v257
        %v259 = vmul.f32 %v258, 0.25
        %v260 = vmul.f32 %v247, %v247
        %v261 = vsub.f32 %v259, %v260
        %v262 = vmax.f32 %v261, 0.0
        %v263 = vadd.f32 %v262, 1e-05
        %v264 = vrsqrt.pop %v263
        %v265 = vld [vmem:[#allocation5] sm:$0x1]
        %v266 = vld [vmem:[#allocation5 + $0x1] sm:$0x1]
        %v267 = vld [vmem:[#allocation5 + $0x2] sm:$0x1]
        %v268 = vld [vmem:[#allocation5 + $0x3] sm:$0x1]
        %v269 = vld [vmem:[#allocation7] sm:$0x1]
        %v270 = vld [vmem:[#allocation7 + $0x1] sm:$0x1]
        %v271 = vld [vmem:[#allocation7 + $0x2] sm:$0x1]
        %v272 = vld [vmem:[#allocation7 + $0x3] sm:$0x1]
        %v273 = vsub.f32 %v235, %v247
        %v274 = vsub.f32 %v236, %v247
        %v275 = vsub.f32 %v237, %v247
        %v276 = vsub.f32 %v238, %v247
        %v277 = vmul.f32 %v273, %v264
        %v278 = vmul.f32 %v274, %v264
        %v279 = vmul.f32 %v275, %v264
        %v280 = vmul.f32 %v276, %v264
        %v285 = vlaneseq
        %v286 = vshrl.u32 %v285, 7
        %v287 = vsub.s32 0, %v286
        %v288 = vrot.slane %v265, %v287
        %v289 = vlaneseq
        %v290 = vshrl.u32 %v289, 7
        %v291 = vsub.s32 0, %v290
        %v292 = vrot.slane %v266, %v291
        %v293 = vlaneseq
        %v294 = vshrl.u32 %v293, 7
        %v295 = vsub.s32 0, %v294
        %v296 = vrot.slane %v267, %v295
        %v297 = vlaneseq
        %v298 = vshrl.u32 %v297, 7
        %v299 = vsub.s32 0, %v298
        %v300 = vrot.slane %v268, %v299
        %v305 = vmul.f32 %v277, %v288
        %v306 = vmul.f32 %v278, %v292
        %v307 = vmul.f32 %v279, %v296
        %v308 = vmul.f32 %v280, %v300
        %v313 = vlaneseq
        %v314 = vshrl.u32 %v313, 7
        %v315 = vsub.s32 0, %v314
        %v316 = vrot.slane %v269, %v315
        %v317 = vlaneseq
        %v318 = vshrl.u32 %v317, 7
        %v319 = vsub.s32 0, %v318
        %v320 = vrot.slane %v270, %v319
        %v321 = vlaneseq
        %v322 = vshrl.u32 %v321, 7
        %v323 = vsub.s32 0, %v322
        %v324 = vrot.slane %v271, %v323
        %v325 = vlaneseq
        %v326 = vshrl.u32 %v325, 7
        %v327 = vsub.s32 0, %v326
        %v328 = vrot.slane %v272, %v327
        %v333 = vadd.f32 %v305, %v316
        %v334 = vadd.f32 %v306, %v320
        %v335 = vadd.f32 %v307, %v324
        %v336 = vadd.f32 %v308, %v328
        %337 = vst [vmem:[%s234] sm:$0x3] %v333
        %338 = vst [vmem:[%s234 + $0x2] sm:$0x3] %v334
        %339 = vst [vmem:[%s234 + $0x4] sm:$0x3] %v335
        %340 = vst [vmem:[%s234 + $0x6] sm:$0x3] %v336
        %s341 = sand.u32 %s113, 1
        %s342 = scalar_lea.sflag [#allocation4], %s341
        %s343 = sand.u32 %s113, 1
        %s344 = smul.addr %s343, 8
        %s345 = scalar_lea.vmem [#allocation8], %s344
        // Predicated region
        $region45: #{tpu_custom_call.1} parent=31 // pred_check
          %p346 = pneg %p123
        $region46: #{tpu_custom_call.1} parent=31 // pred_check_branch
          %348 = sbr.rel (%p346) target = $region48
        $region47: #{tpu_custom_call.1} parent=31 // pred_region
          %s350 = ssub.s32 128, 128
          %351 = vsyncadd %s342, %s350
          %s352 = smul.addr %s25, 4
          %s353 = sadd.s32 %s26, %s352
          %s354 = smul.addr %s353, 32
          %s355 = scalar_lea.hbm %s3, %s354
          %s356 = sshll.u32 %s345, 4
          %s357 = int_to_ptr.vmem [resolvable:$true] %s356
          %362 = dma.vmem_to_hbm [thread:$0]  %s357, 128, %s355, %s342, 32, 32, 2
        $region48: #{tpu_custom_call.1} parent=31 // pred_fallthru
          _
      $region32: #{tpu_custom_call.1} parent=5 // pred_fallthru
        _
      %p363 = scmp.le.s32.totalorder 2, %s16
      // Predicated region
      $region49: #{tpu_custom_call.1} parent=5 // pred_check
        %p364 = pneg %p363
      $region50: #{tpu_custom_call.1} parent=5 // pred_check_branch
        %366 = sbr.rel (%p364) target = $region52
      $region51: #{tpu_custom_call.1} parent=5 // pred_region
        %s367 = ssub.s32 %s16, 2
        // Predicated region
        $region53: #{tpu_custom_call.1} parent=51 // pred_check
          %p368 = pneg %p129
        $region54: #{tpu_custom_call.1} parent=51 // pred_check_branch
          %370 = sbr.rel (%p368) target = $region56
        $region55: #{tpu_custom_call.1} parent=51 // pred_region
          %s371 = sand.u32 %s114, 1
          %s372 = scalar_lea.sflag [#allocation4], %s371
          %s373 = sand.u32 %s114, 1
          %s374 = smul.addr %s373, 8
          %s375 = scalar_lea.vmem [#allocation8], %s374
          %376 = dma.done %s372, 128
        $region56: #{tpu_custom_call.1} parent=51 // pred_fallthru
          _
      $region52: #{tpu_custom_call.1} parent=5 // pred_fallthru
        _
    $region6: #{tpu_custom_call.1} parent=1 // loop_footer
      %s20 = sadd.s32 1, %s16
    $region7: #{tpu_custom_call.1} parent=1 // loop_footer_branch
      %15 = sbr.rel target = $region3
    $region8: #{tpu_custom_call.1} parent=1 // loop_exit
      _
    %377 = vsyncpa [#allocation3], 1
    %s378 = scalar_lea.sflag [#allocation3], 1
    %379 = vsyncpa %s378, 1
    %380 = vsyncpa [#allocation6], 1
    %381 = vsyncpa [#allocation4], 1
    %s382 = scalar_lea.sflag [#allocation4], 1
    %383 = vsyncpa %s382, 1

</llo_original>
